<compile_context>
chip_gen: v7x
topology: tpu7x:2x2x1
jax: 0.10.0
libtpu: 0.0.40
codegen_flags: <defaults>
</compile_context>

<pallas_src>
import functools

import jax
import jax.numpy as jnp
from jax.experimental import pallas as pl
from jax.experimental.pallas import tpu as pltpu


def _fused_decoder_kernel(xt_ref, w2_ref, b2_ref, o_ref, *, Cin, L, K, pad_l, pad_r):
    """One grid step = one batch row; all decoders and all conv taps fused.

    xt_ref: (1, Cin, L)     bf16  input row (channels on sublanes, positions on lanes)
    w2_ref: (D_pad, K*Cin)  bf16  folded conv+linear weights (VMEM resident)
    b2_ref: (D_pad, 1)      f32   folded bias
    o_ref : (1, D_pad, L)   f32   fused output (positions on the lane axis)
    """
    xrow = xt_ref[0]                                            # (Cin, L) bf16
    dt = xrow.dtype

    # 'same' zero halo built as a value (no ref scratch, no extra VMEM copy pass).
    xpad = jnp.concatenate(
        [jnp.zeros((Cin, pad_l), dt), xrow, jnp.zeros((Cin, pad_r), dt)], axis=1)

    # Tap-stacked operand: x2[k*Cin + c, l] = xpad[c, l + k].  The K lane shifts go to
    # the XLU slot; the single matmul keeps full reduction depth K*Cin.
    x2 = jnp.concatenate([xpad[:, k:k + L] for k in range(K)], axis=0)   # (K*Cin, L)

    # One deep MXU contraction for every tap, channel and decoder; f32 accumulation.
    acc = jnp.dot(w2_ref[...], x2, preferred_element_type=jnp.float32)   # (D_pad, L)
    o_ref[0] = acc + b2_ref[...]                                         # f32 epilogue


def parallel_cnn_decoders(x, conv_w, conv_b, lin_w, lin_b):
    """x: (B, L, Cin); conv_w: (D, Cout, Cin, K); conv_b/lin_w: (D, Cout); lin_b: (D,)."""
    B, L, Cin = x.shape
    D, Cout, Cin2, K = conv_w.shape
    assert Cin2 == Cin

    # PyTorch padding='same', even kernel: pad_left = (K-1)//2, pad_right = remainder.
    pad_l = (K - 1) // 2
    pad_r = (K - 1) - pad_l
    D_pad = ((D + 7) // 8) * 8            # full sublane occupancy, unmasked stores

    f32 = jnp.float32
    # Fold Linear(Cout -> 1) into the conv weights (valid: no activation in between).
    w_eff = jnp.einsum('dock,do->dkc', conv_w.astype(f32), lin_w.astype(f32))  # (D,K,Cin)
    w2 = jnp.zeros((D_pad, K * Cin), f32).at[:D].set(w_eff.reshape(D, K * Cin))
    w2 = w2.astype(jnp.bfloat16)
    b_eff = (jnp.einsum('do,do->d', conv_b.astype(f32), lin_w.astype(f32))
             + lin_b.astype(f32))
    b2 = jnp.zeros((D_pad, 1), f32).at[:D, 0].set(b_eff)

    # Channels on sublanes, positions on lanes (lane-dense contraction/output layout).
    xt = jnp.transpose(x, (0, 2, 1)).astype(jnp.bfloat16)        # (B, Cin, L)

    kern = functools.partial(_fused_decoder_kernel,
                             Cin=Cin, L=L, K=K, pad_l=pad_l, pad_r=pad_r)

    flops = 2 * B * L * D_pad * K * Cin
    bytes_accessed = xt.size * 2 + w2.size * 2 + b2.size * 4 + B * D_pad * L * 4

    out = pl.pallas_call(
        kern,
        out_shape=jax.ShapeDtypeStruct((B, D_pad, L), f32),
        grid_spec=pltpu.PrefetchScalarGridSpec(
            num_scalar_prefetch=0,
            grid=(B,),
            in_specs=[
                pl.BlockSpec((1, Cin, L), lambda b: (b, 0, 0)),        # batch row
                pl.BlockSpec((D_pad, K * Cin), lambda b: (0, 0)),      # resident weights
                pl.BlockSpec((D_pad, 1), lambda b: (0, 0)),            # resident bias
            ],
            out_specs=pl.BlockSpec((1, D_pad, L), lambda b: (b, 0, 0)),
        ),
        compiler_params=pltpu.CompilerParams(
            dimension_semantics=("parallel",),       # v7x megacore split over batch
            vmem_limit_bytes=32 * 1024 * 1024,
        ),
        cost_estimate=pl.CostEstimate(flops=flops, transcendentals=0,
                                      bytes_accessed=bytes_accessed),
    )(xt, w2, b2)

    # Per-decoder split: drop the zero-padded decoder rows; each result is (B, L) f32.
    return [out[:, d, :] for d in range(D)]


def reference(x, conv_w, conv_b, lin_w, lin_b):
    """Pure-JAX f32 reference mirroring the PyTorch forward (unfused, two-stage)."""
    x_ncl = jnp.transpose(x, (0, 2, 1))            # (B, Cin, L) == x.permute(0,2,1)
    D, Cout, Cin, K = conv_w.shape
    pad_l = (K - 1) // 2
    pad_r = (K - 1) - pad_l
    outs = []
    for d in range(D):
        y = jax.lax.conv_general_dilated(
            x_ncl, conv_w[d], window_strides=(1,), padding=[(pad_l, pad_r)],
            dimension_numbers=("NCH", "OIH", "NCH"))        # (B, Cout, L)
        y = y + conv_b[d][None, :, None]
        z = jnp.einsum("bcl,c->bl", y, lin_w[d]) + lin_b[d]  # Linear(Cout->1).squeeze(-1)
        outs.append(z)
    return outs


if __name__ == "__main__":
    key = jax.random.PRNGKey(0)
    B, L = 2, 16                 # batch, sequence length
    input_size = 32              # hidden size (Conv1d in_channels)
    output_sizes = [5, 7, 3]     # number of parallel decoders = len(output_sizes)
    D = len(output_sizes)
    Cout, K = 8, 14              # out_channels, kernel_size

    k0, k1, k2, k3 = jax.random.split(key, 4)
    x = jax.random.normal(k0, (B, L, input_size), dtype=jnp.float32)

    # Deterministic parameter init (mirrors SimpleCNN.__init__ intent):
    wr = (1.0 / input_size) ** 0.5
    conv_w = jax.random.uniform(k1, (D, Cout, input_size, K),
                                minval=-wr, maxval=wr, dtype=jnp.float32)
    conv_b = jnp.zeros((D, Cout), jnp.float32)            # nn.init.zeros_(bias)
    lr = (1.0 / Cout) ** 0.5                              # PyTorch Linear default init
    lin_w = jax.random.uniform(k2, (D, Cout), minval=-lr, maxval=lr, dtype=jnp.float32)
    lin_b = jax.random.uniform(k3, (D,), minval=-lr, maxval=lr, dtype=jnp.float32)

    outs = parallel_cnn_decoders(x, conv_w, conv_b, lin_w, lin_b)
    outs = [jax.block_until_ready(o) for o in outs]

    refs = reference(x, conv_w, conv_b, lin_w, lin_b)
    for o, r in zip(outs, refs):
        assert o.shape == (B, L) and o.dtype == jnp.float32
        # bf16 matmul operands (f32 accumulation) -> tolerance widened vs pure f32.
        assert jnp.allclose(o, r, atol=5e-2, rtol=5e-2), float(jnp.max(jnp.abs(o - r)))

    print("KERNEL_OK")
</pallas_src>

<mosaic_0001>
module attributes {stable_mosaic.version = 11 : i64} {
  func.func @_fused_decoder_kernel(%arg0: i32, %arg1: memref<1x32x16xbf16, #tpu.memory_space<vmem>>, %arg2: memref<8x448xbf16, #tpu.memory_space<vmem>>, %arg3: memref<8x1xf32, #tpu.memory_space<vmem>>, %arg4: memref<1x8x16xf32, #tpu.memory_space<vmem>>) attributes {dimension_semantics = [#tpu.dimension_semantics<parallel>], iteration_bounds = array<i64: 2>, scalar_prefetch = 0 : i64, scratch_operands = 0 : i64, tpu.core_type = #tpu.core_type<tc>, window_params = [{transform_indices = @transform_0, window_bounds = array<i64: 1, 32, 16>}, {pipeline_mode = #tpu.pipeline_mode<synchronous>, transform_indices = @transform_1, window_bounds = array<i64: 8, 448>}, {pipeline_mode = #tpu.pipeline_mode<synchronous>, transform_indices = @transform_2, window_bounds = array<i64: 8, 1>}, {transform_indices = @transform_3, window_bounds = array<i64: 1, 8, 16>}]} {
    %c0 = arith.constant 0 : index
    %c0_0 = arith.constant 0 : index
    %c0_1 = arith.constant 0 : index
    %0 = vector.load %arg1[%c0, %c0_0, %c0_1] : memref<1x32x16xbf16, #tpu.memory_space<vmem>>, vector<1x32x16xbf16>
    %1 = vector.shape_cast %0 : vector<1x32x16xbf16> to vector<32x16xbf16>
    %cst = arith.constant 0.000000e+00 : bf16
    %2 = vector.broadcast %cst : bf16 to vector<32x6xbf16>
    %cst_2 = arith.constant 0.000000e+00 : bf16
    %3 = vector.broadcast %cst_2 : bf16 to vector<32x7xbf16>
    %4 = tpu.concatenate %2, %1, %3 in 1 : vector<32x6xbf16>, vector<32x16xbf16>, vector<32x7xbf16> -> vector<32x29xbf16>
    %5 = vector.extract_strided_slice %4 {offsets = [0, 0], sizes = [32, 16], strides = [1, 1]} : vector<32x29xbf16> to vector<32x16xbf16>
    %6 = vector.extract_strided_slice %4 {offsets = [0, 1], sizes = [32, 16], strides = [1, 1]} : vector<32x29xbf16> to vector<32x16xbf16>
    %7 = vector.extract_strided_slice %4 {offsets = [0, 2], sizes = [32, 16], strides = [1, 1]} : vector<32x29xbf16> to vector<32x16xbf16>
    %8 = vector.extract_strided_slice %4 {offsets = [0, 3], sizes = [32, 16], strides = [1, 1]} : vector<32x29xbf16> to vector<32x16xbf16>
    %9 = vector.extract_strided_slice %4 {offsets = [0, 4], sizes = [32, 16], strides = [1, 1]} : vector<32x29xbf16> to vector<32x16xbf16>
    %10 = vector.extract_strided_slice %4 {offsets = [0, 5], sizes = [32, 16], strides = [1, 1]} : vector<32x29xbf16> to vector<32x16xbf16>
    %11 = vector.extract_strided_slice %4 {offsets = [0, 6], sizes = [32, 16], strides = [1, 1]} : vector<32x29xbf16> to vector<32x16xbf16>
    %12 = vector.extract_strided_slice %4 {offsets = [0, 7], sizes = [32, 16], strides = [1, 1]} : vector<32x29xbf16> to vector<32x16xbf16>
    %13 = vector.extract_strided_slice %4 {offsets = [0, 8], sizes = [32, 16], strides = [1, 1]} : vector<32x29xbf16> to vector<32x16xbf16>
    %14 = vector.extract_strided_slice %4 {offsets = [0, 9], sizes = [32, 16], strides = [1, 1]} : vector<32x29xbf16> to vector<32x16xbf16>
    %15 = vector.extract_strided_slice %4 {offsets = [0, 10], sizes = [32, 16], strides = [1, 1]} : vector<32x29xbf16> to vector<32x16xbf16>
    %16 = vector.extract_strided_slice %4 {offsets = [0, 11], sizes = [32, 16], strides = [1, 1]} : vector<32x29xbf16> to vector<32x16xbf16>
    %17 = vector.extract_strided_slice %4 {offsets = [0, 12], sizes = [32, 16], strides = [1, 1]} : vector<32x29xbf16> to vector<32x16xbf16>
    %18 = vector.extract_strided_slice %4 {offsets = [0, 13], sizes = [32, 16], strides = [1, 1]} : vector<32x29xbf16> to vector<32x16xbf16>
    %19 = tpu.concatenate %5, %6, %7, %8, %9, %10, %11, %12, %13, %14, %15, %16, %17, %18 in 0 : vector<32x16xbf16>, vector<32x16xbf16>, vector<32x16xbf16>, vector<32x16xbf16>, vector<32x16xbf16>, vector<32x16xbf16>, vector<32x16xbf16>, vector<32x16xbf16>, vector<32x16xbf16>, vector<32x16xbf16>, vector<32x16xbf16>, vector<32x16xbf16>, vector<32x16xbf16>, vector<32x16xbf16> -> vector<448x16xbf16>
    %c0_3 = arith.constant 0 : index
    %c0_4 = arith.constant 0 : index
    %20 = vector.load %arg2[%c0_3, %c0_4] : memref<8x448xbf16, #tpu.memory_space<vmem>>, vector<8x448xbf16>
    %cst_5 = arith.constant dense<0.000000e+00> : vector<8x16xf32>
    %21 = tpu.matmul %20, %19, %cst_5 {dimension_numbers = #tpu.dot_dimension_numbers<[1], [0], [0], [1], [0, 0, 1, 1], [], []>} : vector<8x448xbf16>, vector<448x16xbf16>, vector<8x16xf32> -> vector<8x16xf32>
    %c0_6 = arith.constant 0 : index
    %c0_7 = arith.constant 0 : index
    %22 = vector.load %arg3[%c0_6, %c0_7] : memref<8x1xf32, #tpu.memory_space<vmem>>, vector<8x1xf32>
    %23 = vector.broadcast %22 : vector<8x1xf32> to vector<8x16xf32>
    %24 = arith.addf %21, %23 : vector<8x16xf32>
    %c0_8 = arith.constant 0 : index
    %c0_9 = arith.constant 0 : index
    %c0_10 = arith.constant 0 : index
    %25 = vector.load %arg4[%c0_8, %c0_9, %c0_10] : memref<1x8x16xf32, #tpu.memory_space<vmem>>, vector<1x8x16xf32>
    %26 = vector.shape_cast %25 : vector<1x8x16xf32> to vector<8x16xf32>
    %27 = vector.shape_cast %24 : vector<8x16xf32> to vector<1x8x16xf32>
    tpu.vector_store %arg4[%c0_8, %c0_9, %c0_10], %27 {strides = array<i32>} : memref<1x8x16xf32, #tpu.memory_space<vmem>>, vector<1x8x16xf32>,
    return
  }
  func.func @transform_0(%arg0: i32) -> (i32, i32, i32) {
    %c0_i32 = arith.constant 0 : i32
    %c0_i32_0 = arith.constant 0 : i32
    %c0_i32_1 = arith.constant 0 : i32
    return %arg0, %c0_i32, %c0_i32_0 : i32, i32, i32
  }
  func.func @transform_1(%arg0: i32) -> (i32, i32) {
    %c0_i32 = arith.constant 0 : i32
    %c0_i32_0 = arith.constant 0 : i32
    %c0_i32_1 = arith.constant 0 : i32
    return %c0_i32, %c0_i32_0 : i32, i32
  }
  func.func @transform_2(%arg0: i32) -> (i32, i32) {
    %c0_i32 = arith.constant 0 : i32
    %c0_i32_0 = arith.constant 0 : i32
    %c0_i32_1 = arith.constant 0 : i32
    return %c0_i32, %c0_i32_0 : i32, i32
  }
  func.func @transform_3(%arg0: i32) -> (i32, i32, i32) {
    %c0_i32 = arith.constant 0 : i32
    %c0_i32_0 = arith.constant 0 : i32
    %c0_i32_1 = arith.constant 0 : i32
    return %arg0, %c0_i32, %c0_i32_0 : i32, i32, i32
  }
}

</mosaic_0001>

<llo_original>
// kernel: tpu_custom_call.1
$region0: #{tpu_custom_call.1}
  #allocation0 [shape = 'u32[]', space=smem, size = 0x4, offset = 0x4, fixed_abs, tag = 'smem constant byte address 0x4 - core index']
  #allocation1 [shape = 'u32[144,128]{1,0:T(1,128)}', space=vmem, size = 0x12000, scoped, tag = 'internal scratch']
  %s0 = inlined_call_operand.vmem [shape: bf16[2,32,16], index: 0, kind: input, shape index: {}]
  %s1 = inlined_call_operand.vmem [shape: bf16[8,448], index: 1, kind: input, shape index: {}]
  %s2 = inlined_call_operand.vmem [shape: f32[8,1], index: 2, kind: input, shape index: {}]
  %s3 = inlined_call_operand.hbm [shape: f32[2,8,16], index: 3, kind: output, shape index: {}]
  %s4 = sld [smem:[#allocation0]]
  $region45: #{tpu_custom_call.1} parent=0
    _
  %s6 = ssub.s32 1, %s4
  %s7 = scalar_select 0, %s6, %s4
  $region1: #{tpu_custom_call.1} parent=0
    #allocation2 [shape = 'u8[8192]{0}', space=vmem, size = 0x2000, scoped, tag = 'output window, operand 0']
    #allocation3 [shape = 's32[2]{0}', space=sflag, size = 0x8, scoped, tag = 'scoped memory for tpu_custom_call.1']
    %8 = vsyncpa [#allocation3], 0
    %s9 = scalar_lea.sflag [#allocation3], 1
    %10 = vsyncpa %s9, 0
    loop: start=0, step=1, limit=4
    $region2: #{tpu_custom_call.1} parent=1 // loop_pre_header
      _
    $region3: #{tpu_custom_call.1} parent=1 // loop_header
      %s12 = sphi 0, %s16
      %p13 = scmp.ge.s32.totalorder %s12, 4
      %s22 = sphi 0, %s24
      %s25 = sphi 0, %s22
      %s26 = sphi 0, %s25
      %s42 = sphi 0, %s26
      %s46 = sphi 0, %s46
      %s48 = sphi 0, %s46
      %s49 = sphi 0, %s48
      %s63 = sphi 0, %s49
      %s67 = sphi 0, %s67
      %s69 = sphi 0, %s67
      %s70 = sphi 0, %s69
      %s84 = sphi 0, %s70
      %s90 = sphi 0, %s92
      %s93 = sphi 0, %s90
      %s94 = sphi 0, %s93
      %s110 = sphi 0, %s94
    $region4: #{tpu_custom_call.1} parent=1 // loop_header_branch
      %15 = sbr.rel (%p13) target = $region8
    $region5: #{tpu_custom_call.1} parent=1 // loop_body
      %s17 = ssub.s32 %s12, 1
      %s18 = ssub.s32 %s12, 2
      %s19 = sadd.s32 %s12, 1
      %s20 = ssub.s32 %s12, %s19
      %p21 = scmp.eq.s32.totalorder %s20, 0
      %s23 = sadd.s32 %s22, 1
      %s24 = scalar_select %p21, %s22, %s23
      %p27 = pneg %p21
      %p28 = scmp.eq.s32.totalorder %s12, 1
      %p29 = por %p27, %p28
      %p30 = scmp.ne.s32.totalorder %s22, %s25
      %p31 = scmp.eq.s32.totalorder %s12, 0
      %p32 = por %p30, %p31
      %p33 = scmp.ne.s32.totalorder %s22, %s25
      %p34 = scmp.eq.s32.totalorder %s17, 1
      %p35 = por %p33, %p34
      %p36 = scmp.ne.s32.totalorder %s25, %s26
      %p37 = scmp.eq.s32.totalorder %s17, 0
      %p38 = por %p36, %p37
      %p39 = scmp.ne.s32.totalorder %s25, %s26
      %p40 = scmp.eq.s32.totalorder %s18, 1
      %p41 = por %p39, %p40
      %p43 = scmp.ne.s32.totalorder %s26, %s42
      %p44 = scmp.eq.s32.totalorder %s18, 0
      %p45 = por %p43, %p44
      %s47 = sadd.s32 %s46, 1
      %p50 = scmp.eq.s32.totalorder %s12, 1
      %p51 = scmp.ne.s32.totalorder %s46, %s48
      %p52 = scmp.eq.s32.totalorder %s12, 0
      %p53 = por %p51, %p52
      %p54 = scmp.ne.s32.totalorder %s46, %s48
      %p55 = scmp.eq.s32.totalorder %s17, 1
      %p56 = por %p54, %p55
      %p57 = scmp.ne.s32.totalorder %s48, %s49
      %p58 = scmp.eq.s32.totalorder %s17, 0
      %p59 = por %p57, %p58
      %p60 = scmp.ne.s32.totalorder %s48, %s49
      %p61 = scmp.eq.s32.totalorder %s18, 1
      %p62 = por %p60, %p61
      %p64 = scmp.ne.s32.totalorder %s49, %s63
      %p65 = scmp.eq.s32.totalorder %s18, 0
      %p66 = por %p64, %p65
      %s68 = sadd.s32 %s67, 1
      %p71 = scmp.eq.s32.totalorder %s12, 1
      %p72 = scmp.ne.s32.totalorder %s67, %s69
      %p73 = scmp.eq.s32.totalorder %s12, 0
      %p74 = por %p72, %p73
      %p75 = scmp.ne.s32.totalorder %s67, %s69
      %p76 = scmp.eq.s32.totalorder %s17, 1
      %p77 = por %p75, %p76
      %p78 = scmp.ne.s32.totalorder %s69, %s70
      %p79 = scmp.eq.s32.totalorder %s17, 0
      %p80 = por %p78, %p79
      %p81 = scmp.ne.s32.totalorder %s69, %s70
      %p82 = scmp.eq.s32.totalorder %s18, 1
      %p83 = por %p81, %p82
      %p85 = scmp.ne.s32.totalorder %s70, %s84
      %p86 = scmp.eq.s32.totalorder %s18, 0
      %p87 = por %p85, %p86
      %s88 = ssub.s32 %s12, %s19
      %p89 = scmp.eq.s32.totalorder %s88, 0
      %s91 = sadd.s32 %s90, 1
      %s92 = scalar_select %p89, %s90, %s91
      %p95 = pneg %p89
      %p96 = scmp.eq.s32.totalorder %s12, 1
      %p97 = por %p95, %p96
      %p98 = scmp.ne.s32.totalorder %s90, %s93
      %p99 = scmp.eq.s32.totalorder %s12, 0
      %p100 = por %p98, %p99
      %p101 = scmp.ne.s32.totalorder %s90, %s93
      %p102 = scmp.eq.s32.totalorder %s17, 1
      %p103 = por %p101, %p102
      %p104 = scmp.ne.s32.totalorder %s93, %s94
      %p105 = scmp.eq.s32.totalorder %s17, 0
      %p106 = por %p104, %p105
      %p107 = scmp.ne.s32.totalorder %s93, %s94
      %p108 = scmp.eq.s32.totalorder %s18, 1
      %p109 = por %p107, %p108
      %p111 = scmp.ne.s32.totalorder %s94, %s110
      %p112 = scmp.eq.s32.totalorder %s18, 0
      %p113 = por %p111, %p112
      %p114 = scmp.le.s32.totalorder 1, %s12
      %p115 = scmp.lt.s32.totalorder %s12, 3
      %p116 = pnand %p114, %p115
      %p117 = pneg %p116
      // Predicated region
      $region9: #{tpu_custom_call.1} parent=5 // pred_check
        _
      $region10: #{tpu_custom_call.1} parent=5 // pred_check_branch
        %119 = sbr.rel (%p116) target = $region12
      $region11: #{tpu_custom_call.1} parent=5 // pred_region
        %s120 = ssub.s32 %s12, 1
        // Predicated region
        $region13: #{tpu_custom_call.1} parent=11 // pred_check
          %p121 = pneg %p59
        $region14: #{tpu_custom_call.1} parent=11 // pred_check_branch
          %123 = sbr.rel (%p121) target = $region16
        $region15: #{tpu_custom_call.1} parent=11 // pred_region
          _
        $region16: #{tpu_custom_call.1} parent=11 // pred_fallthru
          _
        // Predicated region
        $region17: #{tpu_custom_call.1} parent=11 // pred_check
          %p124 = pneg %p80
        $region18: #{tpu_custom_call.1} parent=11 // pred_check_branch
          %126 = sbr.rel (%p124) target = $region20
        $region19: #{tpu_custom_call.1} parent=11 // pred_region
          _
        $region20: #{tpu_custom_call.1} parent=11 // pred_fallthru
          _
      $region12: #{tpu_custom_call.1} parent=5 // pred_fallthru
        _
      %p127 = scmp.lt.s32.totalorder %s12, 2
      // Predicated region
      $region21: #{tpu_custom_call.1} parent=5 // pred_check
        %p128 = pneg %p127
      $region22: #{tpu_custom_call.1} parent=5 // pred_check_branch
        %130 = sbr.rel (%p128) target = $region24
      $region23: #{tpu_custom_call.1} parent=5 // pred_region
        // Predicated region
        $region25: #{tpu_custom_call.1} parent=23 // pred_check
          %p131 = pneg %p32
        $region26: #{tpu_custom_call.1} parent=23 // pred_check_branch
          %133 = sbr.rel (%p131) target = $region28
        $region27: #{tpu_custom_call.1} parent=23 // pred_region
          %p134 = scmp.lt.s32.totalorder %s12, 1
          %s135 = scalar_select %p134, %s12, 1
          %s136 = smul.addr %s135, 4
          %s137 = smul.addr %s136, 4
          %s138 = scalar_lea.vmem %s0, %s137
        $region28: #{tpu_custom_call.1} parent=23 // pred_fallthru
          _
      $region24: #{tpu_custom_call.1} parent=5 // pred_fallthru
        _
      %p139 = scmp.le.s32.totalorder 1, %s12
      %p140 = scmp.lt.s32.totalorder %s12, 3
      %p141 = pnand %p139, %p140
      %p142 = pneg %p141
      // Predicated region
      $region29: #{tpu_custom_call.1} parent=5 // pred_check
        _
      $region30: #{tpu_custom_call.1} parent=5 // pred_check_branch
        %144 = sbr.rel (%p141) target = $region32
      $region31: #{tpu_custom_call.1} parent=5 // pred_region
        %s145 = ssub.s32 %s12, 1
        %p146 = scmp.lt.s32.totalorder %s17, 1
        %s147 = scalar_select %p146, %s17, 1
        %s148 = smul.addr %s147, 4
        %s149 = smul.addr %s148, 4
        %s150 = scalar_lea.vmem %s0, %s149
        %p151 = pneg %p38
        %p152 = pneg %p35
        %p153 = pneg %p59
        %p154 = pneg %p56
        %p155 = pneg %p80
        %p156 = pneg %p77
        %p157 = pneg %p106
        %p158 = pneg %p103
        %s159 = sand.u32 %s93, 1
        %s160 = scalar_lea.sflag [#allocation3], %s159
        %s161 = sand.u32 %s93, 1
        %s162 = smul.addr %s161, 8
        %s163 = scalar_lea.vmem [#allocation2], %s162
        %p164 = scmp.lt.s32.totalorder %s17, 1
        %s165 = scalar_select %p164, %s17, 1
        %s166 = smul.addr %s165, 4
        %s167 = smul.addr %s166, 4
        %s168 = scalar_lea.vmem %s0, %s167
        %v170 = vld [vmem:[%s168] sm:$0xf]
        %v171 = vld [vmem:[%s168 + $0x4] sm:$0xf]
        %v172 = vld [vmem:[%s168 + $0x8] sm:$0xf]
        %v173 = vld [vmem:[%s168 + $0xc] sm:$0xf]
        %v178 = vunpack.c.l.b16 %v170
        %v179 = vunpack.c.l.b16 %v171
        %v180 = vunpack.c.l.b16 %v172
        %v181 = vunpack.c.l.b16 %v173
        %v182 = vpack.c.b16 %v179, %v178
        %v183 = vpack.c.b16 %v181, %v180
        %184 = vrot.lane.b32.xlu0 %v182, 6
        %v185 = vpop.permute.xlu0 %184
        %186 = vrot.lane.b32.xlu0 %v183, 6
        %v187 = vpop.permute.xlu0 %186
        %vm188 = vcmask 48128
        %v191 = vsel %vm188, 0, %v185
        %v193 = vsel %vm188, 0, %v187
        %vm194 = vcmask 179200
        %v195 = vsel %vm194, %v191, 0
        %v197 = vsel %vm194, %v193, 0
        %201 = vrot.lane.b32.xlu0 %v195, 127
        %v202 = vpop.permute.xlu0 %201
        %203 = vrot.lane.b32.xlu0 %v197, 127
        %v204 = vpop.permute.xlu0 %203
        %207 = vrot.lane.b32.xlu0 %v195, 126
        %v208 = vpop.permute.xlu0 %207
        %209 = vrot.lane.b32.xlu0 %v197, 126
        %v210 = vpop.permute.xlu0 %209
        %213 = vrot.lane.b32.xlu0 %v195, 125
        %v214 = vpop.permute.xlu0 %213
        %215 = vrot.lane.b32.xlu0 %v197, 125
        %v216 = vpop.permute.xlu0 %215
        %219 = vrot.lane.b32.xlu0 %v195, 124
        %v220 = vpop.permute.xlu0 %219
        %221 = vrot.lane.b32.xlu0 %v197, 124
        %v222 = vpop.permute.xlu0 %221
        %225 = vrot.lane.b32.xlu0 %v195, 123
        %v226 = vpop.permute.xlu0 %225
        %227 = vrot.lane.b32.xlu0 %v197, 123
        %v228 = vpop.permute.xlu0 %227
        %231 = vrot.lane.b32.xlu0 %v195, 122
        %v232 = vpop.permute.xlu0 %231
        %233 = vrot.lane.b32.xlu0 %v197, 122
        %v234 = vpop.permute.xlu0 %233
        %237 = vrot.lane.b32.xlu0 %v195, 121
        %v238 = vpop.permute.xlu0 %237
        %239 = vrot.lane.b32.xlu0 %v197, 121
        %v240 = vpop.permute.xlu0 %239
        %243 = vrot.lane.b32.xlu0 %v195, 120
        %v244 = vpop.permute.xlu0 %243
        %245 = vrot.lane.b32.xlu0 %v197, 120
        %v246 = vpop.permute.xlu0 %245
        %249 = vrot.lane.b32.xlu0 %v195, 119
        %v250 = vpop.permute.xlu0 %249
        %251 = vrot.lane.b32.xlu0 %v197, 119
        %v252 = vpop.permute.xlu0 %251
        %255 = vrot.lane.b32.xlu0 %v195, 118
        %v256 = vpop.permute.xlu0 %255
        %257 = vrot.lane.b32.xlu0 %v197, 118
        %v258 = vpop.permute.xlu0 %257
        %261 = vrot.lane.b32.xlu0 %v195, 117
        %v262 = vpop.permute.xlu0 %261
        %263 = vrot.lane.b32.xlu0 %v197, 117
        %v264 = vpop.permute.xlu0 %263
        %267 = vrot.lane.b32.xlu0 %v195, 116
        %v268 = vpop.permute.xlu0 %267
        %269 = vrot.lane.b32.xlu0 %v197, 116
        %v270 = vpop.permute.xlu0 %269
        %273 = vrot.lane.b32.xlu0 %v195, 115
        %v274 = vpop.permute.xlu0 %273
        %275 = vrot.lane.b32.xlu0 %v197, 115
        %v276 = vpop.permute.xlu0 %275
        %v279 = vld [vmem:[%s1] sm:$0xff]
        %v280 = vld [vmem:[%s1 + $0x8] sm:$0xff]
        %v281 = vld [vmem:[%s2] sm:$0xff]
        %283 = vset.pattern.permute.xlu0 0
        %284 = vperm.xlu0 %283, %v281
        %v285 = vpop.permute.xlu0 %284
        %v289 = vunpack.c.l.b16 %v279
        %v290 = vunpack.c.h.b16 %v279
        %v291 = vunpack.c.l.b16 %v280
        %v292 = vunpack.c.h.b16 %v280
        %v293 = vpack.c.b16 %v289, %v289
        %v294 = vpack.c.b16 %v290, %v290
        %v295 = vpack.c.b16 %v291, %v291
        %v296 = vpack.c.b16 %v292, %v292
        %vm300 = vcmask 523264
        %v302 = vsel %vm300, %v296, 0
        %304 = vmatprep.subr.bf16.mxu0 0
        %305 = vmatpush1.bf16.msra.mxu0 %v195
        %306 = vmatprep.subr.bf16.mxu0 0
        %307 = vmatpush1.bf16.msra.mxu0 %v197
        %308 = vmatprep.subr.bf16.mxu0 0
        %309 = vmatpush1.bf16.msra.mxu0 %v202
        %310 = vmatprep.subr.bf16.mxu0 0
        %311 = vmatpush1.bf16.msra.mxu0 %v204
        %312 = vmatprep.subr.bf16.mxu0 0
        %313 = vmatpush1.bf16.msra.mxu0 %v208
        %314 = vmatprep.subr.bf16.mxu0 0
        %315 = vmatpush1.bf16.msra.mxu0 %v210
        %316 = vmatprep.subr.bf16.mxu0 0
        %317 = vmatpush1.bf16.msra.mxu0 %v214
        %318 = vmatprep.subr.bf16.mxu0 0
        %319 = vmatpush1.bf16.msra.mxu0 %v216
        %320 = vmatprep.subr.bf16.mxu0 0
        %321 = vmatpush1.bf16.msra.mxu0 %v220
        %322 = vmatprep.subr.bf16.mxu0 0
        %323 = vmatpush1.bf16.msra.mxu0 %v222
        %324 = vmatprep.subr.bf16.mxu0 0
        %325 = vmatpush1.bf16.msra.mxu0 %v226
        %326 = vmatprep.subr.bf16.mxu0 0
        %327 = vmatpush1.bf16.msra.mxu0 %v228
        %328 = vmatprep.subr.bf16.mxu0 0
        %329 = vmatpush1.bf16.msra.mxu0 %v232
        %330 = vmatprep.subr.bf16.mxu0 0
        %331 = vmatpush1.bf16.msra.mxu0 %v234
        %332 = vmatprep.subr.bf16.mxu0 0
        %333 = vmatpush1.bf16.msra.mxu0 %v238
        %334 = vmatprep.subr.bf16.mxu0 0
        %335 = vmatpush1.bf16.msra.mxu0 %v240
        %336 = vmatprep.mubr.bf16.mxu0 %v294
        %337 = vmatmul.mubr.bf16.gmra.mrb[0].mxu0 %v293
        %v338 = vpop.f32.mrb[0].mxu0
        %v339 = vadd.f32 %v285, %v338
        %v340 = vpop.f32.mrb[0].mxu0
        %v341 = vpop.f32.mrb[0].mxu0
        %v342 = vpop.f32.mrb[0].mxu0
        %343 = vdwg.mxu0
        %344 = vmatprep.subr.bf16.mxu0 0
        %345 = vmatpush1.bf16.msra.mxu0 %v244
        %346 = vmatprep.subr.bf16.mxu0 0
        %347 = vmatpush1.bf16.msra.mxu0 %v246
        %348 = vmatprep.subr.bf16.mxu0 0
        %349 = vmatpush1.bf16.msra.mxu0 %v250
        %350 = vmatprep.subr.bf16.mxu0 0
        %351 = vmatpush1.bf16.msra.mxu0 %v252
        %352 = vmatprep.subr.bf16.mxu0 0
        %353 = vmatpush1.bf16.msra.mxu0 %v256
        %354 = vmatprep.subr.bf16.mxu0 0
        %355 = vmatpush1.bf16.msra.mxu0 %v258
        %356 = vmatprep.subr.bf16.mxu0 0
        %357 = vmatpush1.bf16.msra.mxu0 %v262
        %358 = vmatprep.subr.bf16.mxu0 0
        %359 = vmatpush1.bf16.msra.mxu0 %v264
        %360 = vmatprep.subr.bf16.mxu0 0
        %361 = vmatpush1.bf16.msra.mxu0 %v268
        %362 = vmatprep.subr.bf16.mxu0 0
        %363 = vmatpush1.bf16.msra.mxu0 %v270
        %364 = vmatprep.subr.bf16.mxu0 0
        %365 = vmatpush1.bf16.msra.mxu0 %v274
        %366 = vmatprep.subr.bf16.mxu0 0
        %367 = vmatpush1.bf16.msra.mxu0 %v276
        %368 = vmatprep.subr.bf16.mxu0 0
        %369 = vmatpush1.bf16.msra.mxu0 0
        %370 = vmatprep.subr.bf16.mxu0 0
        %371 = vmatpush1.bf16.msra.mxu0 0
        %372 = vmatprep.subr.bf16.mxu0 0
        %373 = vmatpush1.bf16.msra.mxu0 0
        %374 = vmatprep.subr.bf16.mxu0 0
        %375 = vmatpush1.bf16.msra.mxu0 0
        %376 = vmatprep.mubr.bf16.mxu0 %v302
        %377 = vmatmul.mubr.bf16.gmra.mrb[0].mxu0 %v295
        %v378 = vpop.f32.mrb[0].mxu0
        %v379 = vadd.f32 %v339, %v378
        %v380 = vpop.f32.mrb[0].mxu0
        %v381 = vpop.f32.mrb[0].mxu0
        %v382 = vpop.f32.mrb[0].mxu0
        %383 = vdwg.mxu0
        %vm384 = vcmask 130048
        %385 = vst.msk [vmem:[%s163] sm:$0xff] %vm384, %v379
        %s386 = sand.u32 %s93, 1
        %s387 = scalar_lea.sflag [#allocation3], %s386
        %s388 = sand.u32 %s93, 1
        %s389 = smul.addr %s388, 8
        %s390 = scalar_lea.vmem [#allocation2], %s389
        // Predicated region
        $region33: #{tpu_custom_call.1} parent=31 // pred_check
          %p391 = pneg %p103
        $region34: #{tpu_custom_call.1} parent=31 // pred_check_branch
          %393 = sbr.rel (%p391) target = $region36
        $region35: #{tpu_custom_call.1} parent=31 // pred_region
          %s395 = ssub.s32 128, 128
          %396 = vsyncadd %s387, %s395
          %s397 = smul.addr %s17, 128
          %s398 = scalar_lea.hbm %s3, %s397
          %s400 = sshll.u32 %s390, 4
          %s401 = int_to_ptr.vmem [resolvable:$true] %s400
          %403 = dma.vmem_to_hbm [thread:$0]  %s401, 128, %s398, %s387
        $region36: #{tpu_custom_call.1} parent=31 // pred_fallthru
          _
      $region32: #{tpu_custom_call.1} parent=5 // pred_fallthru
        _
      %p404 = scmp.le.s32.totalorder 2, %s12
      // Predicated region
      $region37: #{tpu_custom_call.1} parent=5 // pred_check
        %p405 = pneg %p404
      $region38: #{tpu_custom_call.1} parent=5 // pred_check_branch
        %407 = sbr.rel (%p405) target = $region40
      $region39: #{tpu_custom_call.1} parent=5 // pred_region
        %s408 = ssub.s32 %s12, 2
        // Predicated region
        $region41: #{tpu_custom_call.1} parent=39 // pred_check
          %p409 = pneg %p109
        $region42: #{tpu_custom_call.1} parent=39 // pred_check_branch
          %411 = sbr.rel (%p409) target = $region44
        $region43: #{tpu_custom_call.1} parent=39 // pred_region
          %s412 = sand.u32 %s94, 1
          %s413 = scalar_lea.sflag [#allocation3], %s412
          %s414 = sand.u32 %s94, 1
          %s415 = smul.addr %s414, 8
          %s416 = scalar_lea.vmem [#allocation2], %s415
          %417 = dma.done %s413, 128
        $region44: #{tpu_custom_call.1} parent=39 // pred_fallthru
          _
      $region40: #{tpu_custom_call.1} parent=5 // pred_fallthru
        _
    $region6: #{tpu_custom_call.1} parent=1 // loop_footer
      %s16 = sadd.s32 1, %s12
    $region7: #{tpu_custom_call.1} parent=1 // loop_footer_branch
      %11 = sbr.rel target = $region3
    $region8: #{tpu_custom_call.1} parent=1 // loop_exit
      _
    %418 = vsyncpa [#allocation3], 1
    %s419 = scalar_lea.sflag [#allocation3], 1
    %420 = vsyncpa %s419, 1

</llo_original>
